<compile_context>
chip_gen: v7x
topology: tpu7x:2x2x1
jax: 0.10.0
libtpu: 0.0.40
codegen_flags: <defaults>
</compile_context>

<pallas_src>
import jax
import jax.numpy as jnp
from jax import lax
from jax.experimental import pallas as pl
from jax.experimental.pallas import tpu as pltpu


def _off_diag_matmul_kernel(x_ref, w_ref, o_ref, acc_ref):
    """One (batch-tile, K-tile) step of out.T = (weight*mask) @ x.T.

    x_ref  : (TB, TK)      batch tile of the input
    w_ref  : (n_vars, TK)  masked-weight K slice (resident across batch axis)
    o_ref  : (n_vars, TB)  transposed output tile (lane axis = TB, lane-dense)
    acc_ref: (n_vars, TB)  f32 accumulator scratch
    """
    k = pl.program_id(1)

    @pl.when(k == 0)
    def _():
        acc_ref[...] = jnp.zeros_like(acc_ref)

    # Contract K of both operands: (n_vars, TK) x (TB, TK) -> (n_vars, TB).
    # The MXU consumes the transposed RHS directly; no materialized transpose.
    acc_ref[...] += lax.dot_general(
        w_ref[...],
        x_ref[...],
        dimension_numbers=(((1,), (1,)), ((), ())),
        preferred_element_type=jnp.float32,
    )

    @pl.when(k == pl.num_programs(1) - 1)
    def _():
        o_ref[...] = acc_ref[...].astype(o_ref.dtype)


def _round_up(x, m):
    return ((x + m - 1) // m) * m


def _vmem_info():
    """(physical VMEM bytes, batch-tile cap) with a conservative fallback."""
    try:
        vmem = int(pltpu.get_tpu_info().vmem_capacity_bytes)
    except Exception:
        vmem = 64 * 1024 * 1024  # v7x-sized fallback; safe everywhere
    tb_cap = 2048 if vmem >= 96 * 1024 * 1024 else 1024  # v5e/v6e vs v7x
    return vmem, tb_cap


def _choose_tiles(B, K, n_vars, x_isz, w_isz, o_isz, budget, tb_cap):
    """Pick (tb, tk) so double-buffered tiles + accumulator fit the VMEM budget."""

    def fits(tb, tk):
        est = (2 * tb * tk * x_isz          # x tile (double-buffered)
               + 2 * n_vars * tk * w_isz    # weight tile (double-buffered)
               + 2 * n_vars * tb * o_isz    # output tile (double-buffered)
               + n_vars * tb * 4)           # f32 accumulator scratch
        return est <= budget

    # tk candidates: whole K first, then 128-multiples that divide K exactly
    # (a partial K tile would feed OOB garbage into the reduction).
    tk_list = [K] + [c for c in (4096, 2048, 1024, 512, 256, 128)
                     if c < K and K % c == 0]

    # tb must be a multiple of 128 (lane-dense output store) or equal to B.
    if B <= 256:
        tb_list = [B]
    else:
        # Cap near B/2 so the parallel batch axis has >=2 steps (v7x 2 TCs).
        start = min(tb_cap, max(128, _round_up(pl.cdiv(B, 2), 128)))
        tb_list = list(range(start, 0, -128))

    for tb in tb_list:
        for tk in tk_list:
            if fits(tb, tk):
                return tb, tk
    return tb_list[-1], tk_list[-1]


def off_diagonal_linear(x, weight, mask, *, compute_dtype=None):
    """Forward of OffDiagonalLinear: x @ (weight * mask).T

    x      : (B, n_vars * p)
    weight : (n_vars, n_vars * p)
    mask   : (n_vars, n_vars * p)  static off-diagonal mask
    compute_dtype: optionally cast x / masked weight (e.g. jnp.bfloat16) before
        the matmul; accumulation stays f32.  Default keeps the input dtype.
    returns: (B, n_vars)
    """
    B, K = x.shape
    n_vars, K2 = weight.shape
    assert K == K2, "x last dim must equal n_vars * p"

    # Fold the static mask into the weight once, outside the kernel.
    masked_w = (weight * mask).astype(weight.dtype)
    if compute_dtype is not None:
        x = x.astype(compute_dtype)
        masked_w = masked_w.astype(compute_dtype)
    out_dtype = x.dtype
    o_isz = jnp.dtype(out_dtype).itemsize

    vmem_bytes, tb_cap = _vmem_info()
    budget = vmem_bytes // 2  # headroom for Mosaic's own scratch
    tb, tk = _choose_tiles(B, K, n_vars,
                           x.dtype.itemsize, masked_w.dtype.itemsize,
                           o_isz, budget, tb_cap)

    grid = (pl.cdiv(B, tb), pl.cdiv(K, tk))

    cost = pl.CostEstimate(
        flops=2 * B * K * n_vars,
        transcendentals=0,
        bytes_accessed=(B * K * x.dtype.itemsize
                        + n_vars * K * masked_w.dtype.itemsize
                        + B * n_vars * o_isz),
    )

    out_t = pl.pallas_call(
        _off_diag_matmul_kernel,
        # Transposed (n_vars, B) output so the store's lane axis is the batch
        # tile -> lane-dense, unmasked stores (biggest measured lever).
        out_shape=jax.ShapeDtypeStruct((n_vars, B), out_dtype),
        grid=grid,
        in_specs=[
            pl.BlockSpec((tb, tk), lambda i, k: (i, k)),       # x streams
            pl.BlockSpec((n_vars, tk), lambda i, k: (0, k)),   # weight resident over batch
        ],
        out_specs=pl.BlockSpec((n_vars, tb), lambda i, k: (0, i)),
        scratch_shapes=[pltpu.VMEM((n_vars, tb), jnp.float32)],
        compiler_params=pltpu.CompilerParams(
            # Batch tiles are independent -> "parallel" (shards over v7x's two
            # TensorCores, no-op on v5e/v6e); K is a reduction into the
            # accumulator -> "arbitrary", innermost.
            dimension_semantics=("parallel", "arbitrary"),
            vmem_limit_bytes=int(budget),
        ),
        cost_estimate=cost,
    )(x, masked_w)

    # Tiny (n_vars x B) transpose back to the module's (B, n_vars) layout;
    # a consumer that accepts the NT layout can take out_t directly.
    return out_t.T.astype(out_dtype)


def create_mask(n_vars, p):
    # mask[i, lag*n_vars + j] = 0 iff j == i  (zero own-lag self-connections)
    j = jnp.tile(jnp.arange(n_vars), p)          # (n_vars*p,)
    i = jnp.arange(n_vars)[:, None]              # (n_vars, 1)
    return jnp.where(j[None, :] == i, 0.0, 1.0).astype(jnp.float32)


if __name__ == "__main__":
    n_vars, p = 8, 4
    batch = 16
    K = n_vars * p

    key = jax.random.PRNGKey(0)
    kx, kw = jax.random.split(key)

    # Deterministic synthetic parameters (module __init__ uses zeros; random
    # normals make the masked matmul non-trivial).
    x = jax.random.normal(kx, (batch, K), dtype=jnp.float32)
    weight = jax.random.normal(kw, (n_vars, K), dtype=jnp.float32)
    mask = create_mask(n_vars, p)

    out = off_diagonal_linear(x, weight, mask)
    out = jax.block_until_ready(out)

    # Reference check against plain JAX.
    ref = x @ (weight * mask).T
    assert out.shape == (batch, n_vars)
    assert jnp.allclose(out, ref, atol=1e-4, rtol=1e-4), "mismatch vs reference"

    print("KERNEL_OK")
</pallas_src>

<mosaic_0001>
module attributes {stable_mosaic.version = 11 : i64} {
  func.func @_off_diag_matmul_kernel(%arg0: i32, %arg1: i32, %arg2: memref<16x32xf32, #tpu.memory_space<vmem>>, %arg3: memref<8x32xf32, #tpu.memory_space<vmem>>, %arg4: memref<8x16xf32, #tpu.memory_space<vmem>>, %arg5: memref<8x16xf32, #tpu.memory_space<vmem>>) attributes {dimension_semantics = [#tpu.dimension_semantics<parallel>, #tpu.dimension_semantics<arbitrary>], iteration_bounds = array<i64: 1, 1>, scalar_prefetch = 0 : i64, scratch_operands = 1 : i64, tpu.core_type = #tpu.core_type<tc>, window_params = [{transform_indices = @transform_0, window_bounds = array<i64: 16, 32>}, {transform_indices = @transform_1, window_bounds = array<i64: 8, 32>}, {transform_indices = @transform_2, window_bounds = array<i64: 8, 16>}]} {
    %c0_i32 = arith.constant 0 : i32
    %0 = arith.cmpi eq, %arg1, %c0_i32 : i32
    %1 = arith.extui %0 : i1 to i32
    %c0_i32_0 = arith.constant 0 : i32
    %2 = arith.cmpi ne, %1, %c0_i32_0 : i32
    scf.if %2 {
      %cst_10 = arith.constant 0.000000e+00 : f32
      %12 = vector.broadcast %cst_10 : f32 to vector<8x16xf32>
      %c0_11 = arith.constant 0 : index
      %c0_12 = arith.constant 0 : index
      %13 = vector.load %arg5[%c0_11, %c0_12] : memref<8x16xf32, #tpu.memory_space<vmem>>, vector<8x16xf32>
      tpu.vector_store %arg5[%c0_11, %c0_12], %12 {strides = array<i32>} : memref<8x16xf32, #tpu.memory_space<vmem>>, vector<8x16xf32>,
    } else {
    }
    %c0 = arith.constant 0 : index
    %c0_1 = arith.constant 0 : index
    %3 = vector.load %arg5[%c0, %c0_1] : memref<8x16xf32, #tpu.memory_space<vmem>>, vector<8x16xf32>
    %c0_2 = arith.constant 0 : index
    %c0_3 = arith.constant 0 : index
    %4 = vector.load %arg3[%c0_2, %c0_3] : memref<8x32xf32, #tpu.memory_space<vmem>>, vector<8x32xf32>
    %c0_4 = arith.constant 0 : index
    %c0_5 = arith.constant 0 : index
    %5 = vector.load %arg2[%c0_4, %c0_5] : memref<16x32xf32, #tpu.memory_space<vmem>>, vector<16x32xf32>
    %cst = arith.constant dense<0.000000e+00> : vector<8x16xf32>
    %6 = tpu.matmul %4, %5, %cst {dimension_numbers = #tpu.dot_dimension_numbers<[1], [1], [0], [0], [0, 0, 1, 0], [], []>} : vector<8x32xf32>, vector<16x32xf32>, vector<8x16xf32> -> vector<8x16xf32>
    %7 = arith.addf %3, %6 : vector<8x16xf32>
    %c0_6 = arith.constant 0 : index
    %c0_7 = arith.constant 0 : index
    %8 = vector.load %arg5[%c0_6, %c0_7] : memref<8x16xf32, #tpu.memory_space<vmem>>, vector<8x16xf32>
    tpu.vector_store %arg5[%c0_6, %c0_7], %7 {strides = array<i32>} : memref<8x16xf32, #tpu.memory_space<vmem>>, vector<8x16xf32>,
    %c0_i32_8 = arith.constant 0 : i32
    %9 = arith.cmpi eq, %arg1, %c0_i32_8 : i32
    %10 = arith.extui %9 : i1 to i32
    %c0_i32_9 = arith.constant 0 : i32
    %11 = arith.cmpi ne, %10, %c0_i32_9 : i32
    scf.if %11 {
      %c0_10 = arith.constant 0 : index
      %c0_11 = arith.constant 0 : index
      %12 = vector.load %arg5[%c0_10, %c0_11] : memref<8x16xf32, #tpu.memory_space<vmem>>, vector<8x16xf32>
      %c0_12 = arith.constant 0 : index
      %c0_13 = arith.constant 0 : index
      %13 = vector.load %arg4[%c0_12, %c0_13] : memref<8x16xf32, #tpu.memory_space<vmem>>, vector<8x16xf32>
      tpu.vector_store %arg4[%c0_12, %c0_13], %12 {strides = array<i32>} : memref<8x16xf32, #tpu.memory_space<vmem>>, vector<8x16xf32>,
    } else {
    }
    return
  }
  func.func @transform_0(%arg0: i32, %arg1: i32) -> (i32, i32) {
    %c0_i32 = arith.constant 0 : i32
    return %arg0, %arg1 : i32, i32
  }
  func.func @transform_1(%arg0: i32, %arg1: i32) -> (i32, i32) {
    %c0_i32 = arith.constant 0 : i32
    %c0_i32_0 = arith.constant 0 : i32
    return %c0_i32, %arg1 : i32, i32
  }
  func.func @transform_2(%arg0: i32, %arg1: i32) -> (i32, i32) {
    %c0_i32 = arith.constant 0 : i32
    %c0_i32_0 = arith.constant 0 : i32
    return %c0_i32, %arg0 : i32, i32
  }
}

</mosaic_0001>

<llo_original>
// kernel: tpu_custom_call.1
$region0: #{tpu_custom_call.1}
  #allocation0 [shape = 'u32[]', space=smem, size = 0x4, offset = 0x4, fixed_abs, tag = 'smem constant byte address 0x4 - core index']
  #allocation1 [shape = 'u32[144,128]{1,0:T(1,128)}', space=vmem, size = 0x12000, scoped, tag = 'internal scratch']
  #allocation2 [shape = 'f32[8,16]{1,0:T(8,128)}', space=vmem, size = 0x1000, scoped, tag = 'scratch operand']
  %s0 = inlined_call_operand.hbm [shape: f32[16,32], index: 0, kind: input, shape index: {}]
  %s1 = inlined_call_operand.hbm [shape: f32[8,32], index: 1, kind: input, shape index: {}]
  %s2 = inlined_call_operand.hbm [shape: f32[8,16], index: 2, kind: output, shape index: {}]
  %s3 = sld [smem:[#allocation0]]
  $region34: #{tpu_custom_call.1} parent=0
    _
  %s5 = ssub.s32 1, %s3
  %s6 = scalar_select 0, %s5, %s3
  $region1: #{tpu_custom_call.1} parent=0
    #allocation3 [shape = 'u8[8192]{0}', space=vmem, size = 0x2000, scoped, tag = 'input window, operand 0, single buffered']
    #allocation4 [shape = 's32[1]{0}', space=sflag, size = 0x4, scoped, tag = 'scoped memory for tpu_custom_call.1']
    #allocation5 [shape = 's32[1]{0}', space=sflag, size = 0x4, scoped, tag = 'scoped memory for tpu_custom_call.1']
    #allocation6 [shape = 'u8[4096]{0}', space=vmem, size = 0x1000, scoped, tag = 'input window, operand 1, single buffered']
    #allocation7 [shape = 's32[1]{0}', space=sflag, size = 0x4, scoped, tag = 'scoped memory for tpu_custom_call.1']
    #allocation8 [shape = 'u8[4096]{0}', space=vmem, size = 0x1000, scoped, tag = 'output window, operand 0, single buffered']
    %7 = vsyncpa [#allocation4], 0
    %8 = vsyncpa [#allocation7], 0
    %9 = vsyncpa [#allocation5], 0
    // Predicated region
    $region2: #{tpu_custom_call.1} parent=1 // pred_check
      _
    $region3: #{tpu_custom_call.1} parent=1 // pred_check_branch
      %11 = sbr.rel (0) target = $region5
    $region4: #{tpu_custom_call.1} parent=1 // pred_region
      %s13 = ssub.s32 256, 256
      %14 = vsyncadd [#allocation4], %s13
      %s15 = sshll.u32 [#allocation3], 4
      %s16 = int_to_ptr.vmem [resolvable:$true] %s15
      %21 = dma.hbm_to_vmem [thread:$0]  %s0, 256, %s16, [#allocation4], 128, 128, 8
    $region5: #{tpu_custom_call.1} parent=1 // pred_fallthru
      _
    // Predicated region
    $region6: #{tpu_custom_call.1} parent=1 // pred_check
      _
    $region7: #{tpu_custom_call.1} parent=1 // pred_check_branch
      %23 = sbr.rel (0) target = $region9
    $region8: #{tpu_custom_call.1} parent=1 // pred_region
      %s25 = ssub.s32 128, 128
      %26 = vsyncadd [#allocation7], %s25
      %s28 = sshll.u32 [#allocation6], 4
      %s29 = int_to_ptr.vmem [resolvable:$true] %s28
      %31 = dma.hbm_to_vmem [thread:$0]  %s1, 128, %s29, [#allocation7]
    $region9: #{tpu_custom_call.1} parent=1 // pred_fallthru
      _
    // Predicated region
    $region10: #{tpu_custom_call.1} parent=1 // pred_check
      _
    $region11: #{tpu_custom_call.1} parent=1 // pred_check_branch
      %33 = sbr.rel (0) target = $region13
    $region12: #{tpu_custom_call.1} parent=1 // pred_region
      %34 = dma.done [#allocation4], 256
    $region13: #{tpu_custom_call.1} parent=1 // pred_fallthru
      _
    // Predicated region
    $region14: #{tpu_custom_call.1} parent=1 // pred_check
      _
    $region15: #{tpu_custom_call.1} parent=1 // pred_check_branch
      %36 = sbr.rel (0) target = $region17
    $region16: #{tpu_custom_call.1} parent=1 // pred_region
      %37 = dma.done [#allocation7], 128
    $region17: #{tpu_custom_call.1} parent=1 // pred_fallthru
      _
    %p38 = scmp.eq.s32.totalorder 0, 0
    // Predicated region
    $region18: #{tpu_custom_call.1} parent=1 // pred_check
      %p39 = pneg %p38
    $region19: #{tpu_custom_call.1} parent=1 // pred_check_branch
      %41 = sbr.rel (%p39) target = $region21
    $region20: #{tpu_custom_call.1} parent=1 // pred_region
      %vm42 = vcmask 130048
      %43 = vst.msk [vmem:[#allocation2] sm:$0xff] %vm42, 0.0
    $region21: #{tpu_custom_call.1} parent=1 // pred_fallthru
      _
    %v44 = vld [vmem:[#allocation2] sm:$0xff]
    %v45 = vld [vmem:[#allocation6] sm:$0xff]
    %v46 = vld [vmem:[#allocation3] sm:$0xff]
    %v47 = vld [vmem:[#allocation3 + $0x8] sm:$0xff]
    %vm48 = vcmask 261120
    %v50 = vsel %vm48, %v45, 0
    %v53 = vsel %vm48, %v46, 0
    %v56 = vsel %vm48, %v47, 0
    %58 = vmatprep.subr.mxu0 0.0
    %59 = vmatpush1.xpose.msra.mxu0 %v53
    %60 = vmatprep.subr.mxu0 0.0
    %61 = vmatpush1.xpose.msra.mxu0 %v56
    %62 = vmatprep.subr.mxu0 0.0
    %63 = vmatpush1.xpose.msra.mxu0 0.0
    %64 = vmatprep.subr.mxu0 0.0
    %65 = vmatpush1.xpose.msra.mxu0 0.0
    %66 = vmatprep.subr.mxu0 0.0
    %67 = vmatpush1.xpose.msra.mxu0 0.0
    %68 = vmatprep.subr.mxu0 0.0
    %69 = vmatpush1.xpose.msra.mxu0 0.0
    %70 = vmatprep.subr.mxu0 0.0
    %71 = vmatpush1.xpose.msra.mxu0 0.0
    %72 = vmatprep.subr.mxu0 0.0
    %73 = vmatpush1.xpose.msra.mxu0 0.0
    %74 = vmatprep.subr.mxu0 0.0
    %75 = vmatpush1.xpose.msra.mxu0 0.0
    %76 = vmatprep.subr.mxu0 0.0
    %77 = vmatpush1.xpose.msra.mxu0 0.0
    %78 = vmatprep.subr.mxu0 0.0
    %79 = vmatpush1.xpose.msra.mxu0 0.0
    %80 = vmatprep.subr.mxu0 0.0
    %81 = vmatpush1.xpose.msra.mxu0 0.0
    %82 = vmatprep.subr.mxu0 0.0
    %83 = vmatpush1.xpose.msra.mxu0 0.0
    %84 = vmatprep.subr.mxu0 0.0
    %85 = vmatpush1.xpose.msra.mxu0 0.0
    %86 = vmatprep.subr.mxu0 0.0
    %87 = vmatpush1.xpose.msra.mxu0 0.0
    %88 = vmatprep.subr.mxu0 0.0
    %89 = vmatpush1.xpose.msra.mxu0 0.0
    %90 = vmatprep.subr.mxu0 0.0
    %91 = vmatpush1.xpose.msra.mxu0 0.0
    %92 = vmatprep.subr.mxu0 0.0
    %93 = vmatpush1.xpose.msra.mxu0 0.0
    %94 = vmatprep.subr.mxu0 0.0
    %95 = vmatpush1.xpose.msra.mxu0 0.0
    %96 = vmatprep.subr.mxu0 0.0
    %97 = vmatpush1.xpose.msra.mxu0 0.0
    %98 = vmatprep.subr.mxu0 0.0
    %99 = vmatpush1.xpose.msra.mxu0 0.0
    %100 = vmatprep.subr.mxu0 0.0
    %101 = vmatpush1.xpose.msra.mxu0 0.0
    %102 = vmatprep.subr.mxu0 0.0
    %103 = vmatpush1.xpose.msra.mxu0 0.0
    %104 = vmatprep.subr.mxu0 0.0
    %105 = vmatpush1.xpose.msra.mxu0 0.0
    %106 = vmatprep.subr.mxu0 0.0
    %107 = vmatpush1.xpose.msra.mxu0 0.0
    %108 = vmatprep.subr.mxu0 0.0
    %109 = vmatpush1.xpose.msra.mxu0 0.0
    %110 = vmatprep.subr.mxu0 0.0
    %111 = vmatpush1.xpose.msra.mxu0 0.0
    %112 = vmatprep.subr.mxu0 0.0
    %113 = vmatpush1.xpose.msra.mxu0 0.0
    %114 = vmatprep.subr.mxu0 0.0
    %115 = vmatpush1.xpose.msra.mxu0 0.0
    %116 = vmatprep.subr.mxu0 0.0
    %117 = vmatpush1.xpose.msra.mxu0 0.0
    %118 = vmatprep.subr.mxu0 0.0
    %119 = vmatpush1.xpose.msra.mxu0 0.0
    %120 = vmatprep.subr.mxu0 0.0
    %121 = vmatpush1.xpose.msra.mxu0 0.0
    %122 = vmatprep.mubr.f32.mxu0 0.0
    %123 = vmatmul.mubr.f32.gmra.mrb[0].mxu0 %v50
    %v124 = vpop.f32.mrb[0].mxu0
    %v125 = vadd.f32 0.0, %v124
    %v126 = vpop.f32.mrb[0].mxu0
    %127 = vdwg.mxu0
    %v128 = vadd.f32 %v44, %v125
    %vm129 = vcmask 130048
    %130 = vst.msk [vmem:[#allocation2] sm:$0xff] %vm129, %v128
    // Predicated region
    $region22: #{tpu_custom_call.1} parent=1 // pred_check
      %p131 = pneg %p38
    $region23: #{tpu_custom_call.1} parent=1 // pred_check_branch
      %133 = sbr.rel (%p131) target = $region25
    $region24: #{tpu_custom_call.1} parent=1 // pred_region
      %v134 = vld [vmem:[#allocation2] sm:$0xff]
      %135 = vst.msk [vmem:[#allocation8] sm:$0xff] %vm129, %v134
    $region25: #{tpu_custom_call.1} parent=1 // pred_fallthru
      _
    // Predicated region
    $region26: #{tpu_custom_call.1} parent=1 // pred_check
      _
    $region27: #{tpu_custom_call.1} parent=1 // pred_check_branch
      %137 = sbr.rel (0) target = $region29
    $region28: #{tpu_custom_call.1} parent=1 // pred_region
      %s139 = ssub.s32 128, 128
      %140 = vsyncadd [#allocation5], %s139
      %s142 = sshll.u32 [#allocation8], 4
      %s143 = int_to_ptr.vmem [resolvable:$true] %s142
      %145 = dma.vmem_to_hbm [thread:$0]  %s143, 128, %s2, [#allocation5]
    $region29: #{tpu_custom_call.1} parent=1 // pred_fallthru
      _
    // Predicated region
    $region30: #{tpu_custom_call.1} parent=1 // pred_check
      _
    $region31: #{tpu_custom_call.1} parent=1 // pred_check_branch
      %147 = sbr.rel (0) target = $region33
    $region32: #{tpu_custom_call.1} parent=1 // pred_region
      %148 = dma.done [#allocation5], 128
    $region33: #{tpu_custom_call.1} parent=1 // pred_fallthru
      _
    %149 = vsyncpa [#allocation4], 1
    %150 = vsyncpa [#allocation7], 1
    %151 = vsyncpa [#allocation5], 1

</llo_original>
